<compile_context>
chip_gen: v7x
topology: tpu7x:2x2x1
jax: 0.10.0
libtpu: 0.0.40
codegen_flags: <defaults>
</compile_context>

<pallas_src>
import jax
import jax.numpy as jnp
from jax.experimental import pallas as pl
from jax.experimental.pallas import tpu as pltpu


def _se_kernel(x_ref, w1t_ref, b1_ref, w2t_ref, b2_ref, o_ref):
    # x_ref:   (TB, HW, C)  channels-last block, one grid step = TB samples
    # w1t_ref: (C, R), b1_ref: (1, R)
    # w2t_ref: (R, C), b2_ref: (1, C)
    # o_ref:   (TB, HW, C)
    x = x_ref[...]                                     # (TB, HW, C) f32
    hw = x.shape[1]

    # --- squeeze: global average pool over spatial (sublane) axis ------------
    pooled = jnp.sum(x, axis=1) * (1.0 / hw)           # (TB, C)

    # --- excitation: 1x1 conv (C->R) + ReLU ----------------------------------
    h = jnp.dot(pooled, w1t_ref[...],
                preferred_element_type=jnp.float32) + b1_ref[...]   # (TB, R)
    h = jnp.maximum(h, 0.0)

    # --- 1x1 conv (R->C) + Sigmoid -------------------------------------------
    g = jnp.dot(h, w2t_ref[...],
                preferred_element_type=jnp.float32) + b2_ref[...]   # (TB, C)
    g = jax.nn.sigmoid(g)

    # --- scale: broadcast channel gate over spatial (sublane) axis -----------
    o_ref[...] = x * g[:, None, :]                     # (TB, HW, C)


def squeeze_excitation(x_nchw, w1, b1, w2, b2,
                       *, max_xy_block_bytes=24 * 1024 * 1024):
    """x_nchw: (N, C, H, W) float32. w1: (R, C), b1: (R,), w2: (C, R), b2: (C,)."""
    N, C, H, W = x_nchw.shape
    R = w1.shape[0]
    HW = H * W

    # Channels-last flatten: (N, HW, C) -> lane axis is C (lane-dense stores).
    x_flat = jnp.transpose(x_nchw, (0, 2, 3, 1)).reshape(N, HW, C)

    # Pre-transpose weights once on the host (grid-invariant -> no in-kernel XLU).
    w1t = jnp.transpose(w1)            # (C, R)
    w2t = jnp.transpose(w2)            # (R, C)
    b1_2d = b1.reshape(1, R)
    b2_2d = b2.reshape(1, C)

    # --- choose TB (samples per grid step) from an explicit VMEM budget -------
    # double-buffered input block + double-buffered output block:
    #   4 * TB * HW * C * itemsize  <=  max_xy_block_bytes
    itemsize = jnp.dtype(x_nchw.dtype).itemsize
    bytes_per_sample = HW * C * itemsize
    tb_cap = max(1, max_xy_block_bytes // (4 * bytes_per_sample))
    TB = min(N, int(tb_cap))
    while N % TB != 0:                 # keep the grid exact (no ragged block)
        TB -= 1
    grid = (N // TB,)

    # Scoped-VMEM limit: enough for the budgeted blocks + weights + headroom,
    # kept under v7x's 64 MiB physical VMEM (v5e/v6e have 128 MiB).
    vmem_limit_bytes = 40 * 1024 * 1024

    out = pl.pallas_call(
        _se_kernel,
        out_shape=jax.ShapeDtypeStruct((N, HW, C), x_nchw.dtype),
        grid_spec=pltpu.PrefetchScalarGridSpec(
            num_scalar_prefetch=0,
            grid=grid,
            in_specs=[
                pl.BlockSpec((TB, HW, C), lambda n: (n, 0, 0)),  # x (per-step block)
                pl.BlockSpec((C, R), lambda n: (0, 0)),          # w1t (resident)
                pl.BlockSpec((1, R), lambda n: (0, 0)),          # b1
                pl.BlockSpec((R, C), lambda n: (0, 0)),          # w2t
                pl.BlockSpec((1, C), lambda n: (0, 0)),          # b2
            ],
            out_specs=pl.BlockSpec((TB, HW, C), lambda n: (n, 0, 0)),
        ),
        compiler_params=pltpu.CompilerParams(
            dimension_semantics=("parallel",),
            vmem_limit_bytes=vmem_limit_bytes,
        ),
    )(x_flat, w1t, b1_2d, w2t, b2_2d)

    # Back to NCHW.
    return jnp.transpose(out.reshape(N, H, W, C), (0, 3, 1, 2))


def reference_se(x, w1, b1, w2, b2):
    pooled = jnp.mean(x, axis=(2, 3))                       # (N, C)
    h = jnp.maximum(pooled @ w1.T + b1, 0.0)                # (N, R)
    g = jax.nn.sigmoid(h @ w2.T + b2)                       # (N, C)
    return x * g[:, :, None, None]


if __name__ == "__main__":
    # Small shapes consistent with the module: batch=2, channels=4, spatial=16,
    # reduced_dim=2.
    N, C, H, W = 2, 4, 16, 16
    R = 2

    key = jax.random.PRNGKey(0)
    kx, kw1, kb1, kw2, kb2 = jax.random.split(key, 5)

    x = jax.random.normal(kx, (N, C, H, W), dtype=jnp.float32)
    # nn.Conv2d(in, out, 1) weight shape => (out, in).
    w1 = jax.random.normal(kw1, (R, C), dtype=jnp.float32) * (1.0 / jnp.sqrt(C))
    b1 = jax.random.normal(kb1, (R,), dtype=jnp.float32) * 0.1
    w2 = jax.random.normal(kw2, (C, R), dtype=jnp.float32) * (1.0 / jnp.sqrt(R))
    b2 = jax.random.normal(kb2, (C,), dtype=jnp.float32) * 0.1

    y = squeeze_excitation(x, w1, b1, w2, b2)
    y = jax.block_until_ready(y)

    y_ref = reference_se(x, w1, b1, w2, b2)
    assert y.shape == (N, C, H, W)
    assert jnp.allclose(y, y_ref, atol=1e-5, rtol=1e-5), "mismatch vs reference"

    print("KERNEL_OK")
</pallas_src>

<mosaic_0001>
module attributes {stable_mosaic.version = 11 : i64} {
  func.func @_se_kernel(%arg0: i32, %arg1: memref<2x256x4xf32, #tpu.memory_space<vmem>>, %arg2: memref<4x2xf32, #tpu.memory_space<vmem>>, %arg3: memref<1x2xf32, #tpu.memory_space<vmem>>, %arg4: memref<2x4xf32, #tpu.memory_space<vmem>>, %arg5: memref<1x4xf32, #tpu.memory_space<vmem>>, %arg6: memref<2x256x4xf32, #tpu.memory_space<vmem>>) attributes {dimension_semantics = [#tpu.dimension_semantics<parallel>], iteration_bounds = array<i64: 1>, scalar_prefetch = 0 : i64, scratch_operands = 0 : i64, tpu.core_type = #tpu.core_type<tc>, window_params = [{transform_indices = @transform_0, window_bounds = array<i64: 2, 256, 4>}, {pipeline_mode = #tpu.pipeline_mode<synchronous>, transform_indices = @transform_1, window_bounds = array<i64: 4, 2>}, {pipeline_mode = #tpu.pipeline_mode<synchronous>, transform_indices = @transform_2, window_bounds = array<i64: 1, 2>}, {pipeline_mode = #tpu.pipeline_mode<synchronous>, transform_indices = @transform_3, window_bounds = array<i64: 2, 4>}, {pipeline_mode = #tpu.pipeline_mode<synchronous>, transform_indices = @transform_4, window_bounds = array<i64: 1, 4>}, {transform_indices = @transform_5, window_bounds = array<i64: 2, 256, 4>}]} {
    %c0 = arith.constant 0 : index
    %c0_0 = arith.constant 0 : index
    %c0_1 = arith.constant 0 : index
    %0 = vector.load %arg1[%c0, %c0_0, %c0_1] : memref<2x256x4xf32, #tpu.memory_space<vmem>>, vector<2x256x4xf32>
    %cst = arith.constant dense<0.000000e+00> : vector<2x4xf32>
    %1 = vector.multi_reduction <add>, %0, %cst [1] : vector<2x256x4xf32> to vector<2x4xf32>
    %cst_2 = arith.constant 3.906250e-03 : f32
    %2 = vector.broadcast %cst_2 : f32 to vector<2x4xf32>
    %3 = arith.mulf %1, %2 : vector<2x4xf32>
    %c0_3 = arith.constant 0 : index
    %c0_4 = arith.constant 0 : index
    %4 = vector.load %arg2[%c0_3, %c0_4] : memref<4x2xf32, #tpu.memory_space<vmem>>, vector<4x2xf32>
    %cst_5 = arith.constant dense<0.000000e+00> : vector<2x2xf32>
    %5 = tpu.matmul %3, %4, %cst_5 {dimension_numbers = #tpu.dot_dimension_numbers<[1], [0], [0], [1], [0, 0, 1, 1], [], []>} : vector<2x4xf32>, vector<4x2xf32>, vector<2x2xf32> -> vector<2x2xf32>
    %c0_6 = arith.constant 0 : index
    %c0_7 = arith.constant 0 : index
    %6 = vector.load %arg3[%c0_6, %c0_7] : memref<1x2xf32, #tpu.memory_space<vmem>>, vector<1x2xf32>
    %7 = vector.broadcast %6 : vector<1x2xf32> to vector<2x2xf32>
    %8 = arith.addf %5, %7 : vector<2x2xf32>
    %cst_8 = arith.constant 0.000000e+00 : f32
    %9 = vector.broadcast %cst_8 : f32 to vector<2x2xf32>
    %10 = arith.maximumf %8, %9 : vector<2x2xf32>
    %c0_9 = arith.constant 0 : index
    %c0_10 = arith.constant 0 : index
    %11 = vector.load %arg4[%c0_9, %c0_10] : memref<2x4xf32, #tpu.memory_space<vmem>>, vector<2x4xf32>
    %cst_11 = arith.constant dense<0.000000e+00> : vector<2x4xf32>
    %12 = tpu.matmul %10, %11, %cst_11 {dimension_numbers = #tpu.dot_dimension_numbers<[1], [0], [0], [1], [0, 0, 1, 1], [], []>} : vector<2x2xf32>, vector<2x4xf32>, vector<2x4xf32> -> vector<2x4xf32>
    %c0_12 = arith.constant 0 : index
    %c0_13 = arith.constant 0 : index
    %13 = vector.load %arg5[%c0_12, %c0_13] : memref<1x4xf32, #tpu.memory_space<vmem>>, vector<1x4xf32>
    %14 = vector.broadcast %13 : vector<1x4xf32> to vector<2x4xf32>
    %15 = arith.addf %12, %14 : vector<2x4xf32>
    %16 = arith.negf %15 : vector<2x4xf32>
    %17 = math.exp %16 : vector<2x4xf32>
    %cst_14 = arith.constant 1.000000e+00 : f32
    %18 = vector.broadcast %cst_14 : f32 to vector<2x4xf32>
    %19 = arith.addf %18, %17 : vector<2x4xf32>
    %20 = arith.divf %18, %19 : vector<2x4xf32>
    %21 = vector.shape_cast %20 : vector<2x4xf32> to vector<2x1x4xf32>
    %22 = vector.broadcast %21 : vector<2x1x4xf32> to vector<2x256x4xf32>
    %23 = arith.mulf %0, %22 : vector<2x256x4xf32>
    %c0_15 = arith.constant 0 : index
    %c0_16 = arith.constant 0 : index
    %c0_17 = arith.constant 0 : index
    %24 = vector.load %arg6[%c0_15, %c0_16, %c0_17] : memref<2x256x4xf32, #tpu.memory_space<vmem>>, vector<2x256x4xf32>
    tpu.vector_store %arg6[%c0_15, %c0_16, %c0_17], %23 {strides = array<i32>} : memref<2x256x4xf32, #tpu.memory_space<vmem>>, vector<2x256x4xf32>,
    return
  }
  func.func @transform_0(%arg0: i32) -> (i32, i32, i32) {
    %c0_i32 = arith.constant 0 : i32
    %c0_i32_0 = arith.constant 0 : i32
    %c0_i32_1 = arith.constant 0 : i32
    return %arg0, %c0_i32, %c0_i32_0 : i32, i32, i32
  }
  func.func @transform_1(%arg0: i32) -> (i32, i32) {
    %c0_i32 = arith.constant 0 : i32
    %c0_i32_0 = arith.constant 0 : i32
    %c0_i32_1 = arith.constant 0 : i32
    return %c0_i32, %c0_i32_0 : i32, i32
  }
  func.func @transform_2(%arg0: i32) -> (i32, i32) {
    %c0_i32 = arith.constant 0 : i32
    %c0_i32_0 = arith.constant 0 : i32
    %c0_i32_1 = arith.constant 0 : i32
    return %c0_i32, %c0_i32_0 : i32, i32
  }
  func.func @transform_3(%arg0: i32) -> (i32, i32) {
    %c0_i32 = arith.constant 0 : i32
    %c0_i32_0 = arith.constant 0 : i32
    %c0_i32_1 = arith.constant 0 : i32
    return %c0_i32, %c0_i32_0 : i32, i32
  }
  func.func @transform_4(%arg0: i32) -> (i32, i32) {
    %c0_i32 = arith.constant 0 : i32
    %c0_i32_0 = arith.constant 0 : i32
    %c0_i32_1 = arith.constant 0 : i32
    return %c0_i32, %c0_i32_0 : i32, i32
  }
  func.func @transform_5(%arg0: i32) -> (i32, i32, i32) {
    %c0_i32 = arith.constant 0 : i32
    %c0_i32_0 = arith.constant 0 : i32
    %c0_i32_1 = arith.constant 0 : i32
    return %arg0, %c0_i32, %c0_i32_0 : i32, i32, i32
  }
}

</mosaic_0001>

<llo_original>
// kernel: tpu_custom_call.1
$region0: #{tpu_custom_call.1}
  #allocation0 [shape = 'u32[]', space=smem, size = 0x4, offset = 0x4, fixed_abs, tag = 'smem constant byte address 0x4 - core index']
  #allocation1 [shape = 'u32[144,128]{1,0:T(1,128)}', space=vmem, size = 0x12000, scoped, tag = 'internal scratch']
  %s0 = inlined_call_operand.vmem [shape: f32[2,256,4], index: 0, kind: input, shape index: {}]
  %s1 = inlined_call_operand.vmem [shape: f32[4,2], index: 1, kind: input, shape index: {}]
  %s2 = inlined_call_operand.vmem [shape: f32[1,2], index: 2, kind: input, shape index: {}]
  %s3 = inlined_call_operand.vmem [shape: f32[2,4], index: 3, kind: input, shape index: {}]
  %s4 = inlined_call_operand.vmem [shape: f32[1,4], index: 4, kind: input, shape index: {}]
  %s5 = inlined_call_operand.vmem [shape: f32[2,256,4], index: 5, kind: output, shape index: {}]
  %s6 = sld [smem:[#allocation0]]
  $region30: #{tpu_custom_call.1} parent=0
    _
  %s8 = ssub.s32 1, %s6
  %s9 = scalar_select 0, %s8, %s6
  // Predicated region
  $region2: #{tpu_custom_call.1} parent=0 // pred_check
    _
  $region3: #{tpu_custom_call.1} parent=0 // pred_check_branch
    %11 = sbr.rel (0) target = $region5
  $region4: #{tpu_custom_call.1} parent=0 // pred_region
    _
  $region5: #{tpu_custom_call.1} parent=0 // pred_fallthru
    _
  // Predicated region
  $region6: #{tpu_custom_call.1} parent=0 // pred_check
    _
  $region7: #{tpu_custom_call.1} parent=0 // pred_check_branch
    %13 = sbr.rel (0) target = $region9
  $region8: #{tpu_custom_call.1} parent=0 // pred_region
    _
  $region9: #{tpu_custom_call.1} parent=0 // pred_fallthru
    _
  // Predicated region
  $region10: #{tpu_custom_call.1} parent=0 // pred_check
    _
  $region11: #{tpu_custom_call.1} parent=0 // pred_check_branch
    %15 = sbr.rel (0) target = $region13
  $region12: #{tpu_custom_call.1} parent=0 // pred_region
    _
  $region13: #{tpu_custom_call.1} parent=0 // pred_fallthru
    _
  // Predicated region
  $region14: #{tpu_custom_call.1} parent=0 // pred_check
    _
  $region15: #{tpu_custom_call.1} parent=0 // pred_check_branch
    %17 = sbr.rel (0) target = $region17
  $region16: #{tpu_custom_call.1} parent=0 // pred_region
    _
  $region17: #{tpu_custom_call.1} parent=0 // pred_fallthru
    _
  // Predicated region
  $region18: #{tpu_custom_call.1} parent=0 // pred_check
    _
  $region19: #{tpu_custom_call.1} parent=0 // pred_check_branch
    %19 = sbr.rel (0) target = $region21
  $region20: #{tpu_custom_call.1} parent=0 // pred_region
    _
  $region21: #{tpu_custom_call.1} parent=0 // pred_fallthru
    _
  %v20 = vld [vmem:[%s0] sm:$0xff]
  %v21 = vld [vmem:[%s0 + $0x8] sm:$0xff]
  %v22 = vld [vmem:[%s0 + $0x10] sm:$0xff]
  %v23 = vld [vmem:[%s0 + $0x18] sm:$0xff]
  %v24 = vld [vmem:[%s0 + $0x20] sm:$0xff]
  %v25 = vld [vmem:[%s0 + $0x28] sm:$0xff]
  %v26 = vld [vmem:[%s0 + $0x30] sm:$0xff]
  %v27 = vld [vmem:[%s0 + $0x38] sm:$0xff]
  %v28 = vld [vmem:[%s0 + $0x40] sm:$0xff]
  %v29 = vld [vmem:[%s0 + $0x48] sm:$0xff]
  %v30 = vld [vmem:[%s0 + $0x50] sm:$0xff]
  %v31 = vld [vmem:[%s0 + $0x58] sm:$0xff]
  %v32 = vld [vmem:[%s0 + $0x60] sm:$0xff]
  %v33 = vld [vmem:[%s0 + $0x68] sm:$0xff]
  %v34 = vld [vmem:[%s0 + $0x70] sm:$0xff]
  %v35 = vld [vmem:[%s0 + $0x78] sm:$0xff]
  %v36 = vld [vmem:[%s0 + $0x80] sm:$0xff]
  %v37 = vld [vmem:[%s0 + $0x88] sm:$0xff]
  %v38 = vld [vmem:[%s0 + $0x90] sm:$0xff]
  %v39 = vld [vmem:[%s0 + $0x98] sm:$0xff]
  %v40 = vld [vmem:[%s0 + $0xa0] sm:$0xff]
  %v41 = vld [vmem:[%s0 + $0xa8] sm:$0xff]
  %v42 = vld [vmem:[%s0 + $0xb0] sm:$0xff]
  %v43 = vld [vmem:[%s0 + $0xb8] sm:$0xff]
  %v44 = vld [vmem:[%s0 + $0xc0] sm:$0xff]
  %v45 = vld [vmem:[%s0 + $0xc8] sm:$0xff]
  %v46 = vld [vmem:[%s0 + $0xd0] sm:$0xff]
  %v47 = vld [vmem:[%s0 + $0xd8] sm:$0xff]
  %v48 = vld [vmem:[%s0 + $0xe0] sm:$0xff]
  %v49 = vld [vmem:[%s0 + $0xe8] sm:$0xff]
  %v50 = vld [vmem:[%s0 + $0xf0] sm:$0xff]
  %v51 = vld [vmem:[%s0 + $0xf8] sm:$0xff]
  %v52 = vld [vmem:[%s0 + $0x100] sm:$0xff]
  %v53 = vld [vmem:[%s0 + $0x108] sm:$0xff]
  %v54 = vld [vmem:[%s0 + $0x110] sm:$0xff]
  %v55 = vld [vmem:[%s0 + $0x118] sm:$0xff]
  %v56 = vld [vmem:[%s0 + $0x120] sm:$0xff]
  %v57 = vld [vmem:[%s0 + $0x128] sm:$0xff]
  %v58 = vld [vmem:[%s0 + $0x130] sm:$0xff]
  %v59 = vld [vmem:[%s0 + $0x138] sm:$0xff]
  %v60 = vld [vmem:[%s0 + $0x140] sm:$0xff]
  %v61 = vld [vmem:[%s0 + $0x148] sm:$0xff]
  %v62 = vld [vmem:[%s0 + $0x150] sm:$0xff]
  %v63 = vld [vmem:[%s0 + $0x158] sm:$0xff]
  %v64 = vld [vmem:[%s0 + $0x160] sm:$0xff]
  %v65 = vld [vmem:[%s0 + $0x168] sm:$0xff]
  %v66 = vld [vmem:[%s0 + $0x170] sm:$0xff]
  %v67 = vld [vmem:[%s0 + $0x178] sm:$0xff]
  %v68 = vld [vmem:[%s0 + $0x180] sm:$0xff]
  %v69 = vld [vmem:[%s0 + $0x188] sm:$0xff]
  %v70 = vld [vmem:[%s0 + $0x190] sm:$0xff]
  %v71 = vld [vmem:[%s0 + $0x198] sm:$0xff]
  %v72 = vld [vmem:[%s0 + $0x1a0] sm:$0xff]
  %v73 = vld [vmem:[%s0 + $0x1a8] sm:$0xff]
  %v74 = vld [vmem:[%s0 + $0x1b0] sm:$0xff]
  %v75 = vld [vmem:[%s0 + $0x1b8] sm:$0xff]
  %v76 = vld [vmem:[%s0 + $0x1c0] sm:$0xff]
  %v77 = vld [vmem:[%s0 + $0x1c8] sm:$0xff]
  %v78 = vld [vmem:[%s0 + $0x1d0] sm:$0xff]
  %v79 = vld [vmem:[%s0 + $0x1d8] sm:$0xff]
  %v80 = vld [vmem:[%s0 + $0x1e0] sm:$0xff]
  %v81 = vld [vmem:[%s0 + $0x1e8] sm:$0xff]
  %v82 = vld [vmem:[%s0 + $0x1f0] sm:$0xff]
  %v83 = vld [vmem:[%s0 + $0x1f8] sm:$0xff]
  %vm84 = vcmask 31744
  %v85 = vsel %vm84, %v20, 0.0
  %v86 = vsel %vm84, %v21, 0.0
  %v87 = vadd.f32 %v85, %v86
  %v88 = vsel %vm84, %v22, 0.0
  %v89 = vadd.f32 %v87, %v88
  %v90 = vsel %vm84, %v23, 0.0
  %v91 = vadd.f32 %v89, %v90
  %v92 = vsel %vm84, %v24, 0.0
  %v93 = vadd.f32 %v91, %v92
  %v94 = vsel %vm84, %v25, 0.0
  %v95 = vadd.f32 %v93, %v94
  %v96 = vsel %vm84, %v26, 0.0
  %v97 = vadd.f32 %v95, %v96
  %v98 = vsel %vm84, %v27, 0.0
  %v99 = vadd.f32 %v97, %v98
  %v100 = vsel %vm84, %v28, 0.0
  %v101 = vadd.f32 %v99, %v100
  %v102 = vsel %vm84, %v29, 0.0
  %v103 = vadd.f32 %v101, %v102
  %v104 = vsel %vm84, %v30, 0.0
  %v105 = vadd.f32 %v103, %v104
  %v106 = vsel %vm84, %v31, 0.0
  %v107 = vadd.f32 %v105, %v106
  %v108 = vsel %vm84, %v32, 0.0
  %v109 = vadd.f32 %v107, %v108
  %v110 = vsel %vm84, %v33, 0.0
  %v111 = vadd.f32 %v109, %v110
  %v112 = vsel %vm84, %v34, 0.0
  %v113 = vadd.f32 %v111, %v112
  %v114 = vsel %vm84, %v35, 0.0
  %v115 = vadd.f32 %v113, %v114
  %v116 = vsel %vm84, %v36, 0.0
  %v117 = vadd.f32 %v115, %v116
  %v118 = vsel %vm84, %v37, 0.0
  %v119 = vadd.f32 %v117, %v118
  %v120 = vsel %vm84, %v38, 0.0
  %v121 = vadd.f32 %v119, %v120
  %v122 = vsel %vm84, %v39, 0.0
  %v123 = vadd.f32 %v121, %v122
  %v124 = vsel %vm84, %v40, 0.0
  %v125 = vadd.f32 %v123, %v124
  %v126 = vsel %vm84, %v41, 0.0
  %v127 = vadd.f32 %v125, %v126
  %v128 = vsel %vm84, %v42, 0.0
  %v129 = vadd.f32 %v127, %v128
  %v130 = vsel %vm84, %v43, 0.0
  %v131 = vadd.f32 %v129, %v130
  %v132 = vsel %vm84, %v44, 0.0
  %v133 = vadd.f32 %v131, %v132
  %v134 = vsel %vm84, %v45, 0.0
  %v135 = vadd.f32 %v133, %v134
  %v136 = vsel %vm84, %v46, 0.0
  %v137 = vadd.f32 %v135, %v136
  %v138 = vsel %vm84, %v47, 0.0
  %v139 = vadd.f32 %v137, %v138
  %v140 = vsel %vm84, %v48, 0.0
  %v141 = vadd.f32 %v139, %v140
  %v142 = vsel %vm84, %v49, 0.0
  %v143 = vadd.f32 %v141, %v142
  %v144 = vsel %vm84, %v50, 0.0
  %v145 = vadd.f32 %v143, %v144
  %v146 = vsel %vm84, %v51, 0.0
  %v147 = vadd.f32 %v145, %v146
  %v148 = vrot.slane %v147, 4
  %v149 = vadd.f32 %v147, %v148
  %v150 = vrot.slane %v149, 2
  %v151 = vadd.f32 %v149, %v150
  %v152 = vrot.slane %v151, 1
  %v153 = vadd.f32 %v151, %v152
  %v154 = vsel %vm84, %v52, 0.0
  %v155 = vsel %vm84, %v53, 0.0
  %v156 = vadd.f32 %v154, %v155
  %v157 = vsel %vm84, %v54, 0.0
  %v158 = vadd.f32 %v156, %v157
  %v159 = vsel %vm84, %v55, 0.0
  %v160 = vadd.f32 %v158, %v159
  %v161 = vsel %vm84, %v56, 0.0
  %v162 = vadd.f32 %v160, %v161
  %v163 = vsel %vm84, %v57, 0.0
  %v164 = vadd.f32 %v162, %v163
  %v165 = vsel %vm84, %v58, 0.0
  %v166 = vadd.f32 %v164, %v165
  %v167 = vsel %vm84, %v59, 0.0
  %v168 = vadd.f32 %v166, %v167
  %v169 = vsel %vm84, %v60, 0.0
  %v170 = vadd.f32 %v168, %v169
  %v171 = vsel %vm84, %v61, 0.0
  %v172 = vadd.f32 %v170, %v171
  %v173 = vsel %vm84, %v62, 0.0
  %v174 = vadd.f32 %v172, %v173
  %v175 = vsel %vm84, %v63, 0.0
  %v176 = vadd.f32 %v174, %v175
  %v177 = vsel %vm84, %v64, 0.0
  %v178 = vadd.f32 %v176, %v177
  %v179 = vsel %vm84, %v65, 0.0
  %v180 = vadd.f32 %v178, %v179
  %v181 = vsel %vm84, %v66, 0.0
  %v182 = vadd.f32 %v180, %v181
  %v183 = vsel %vm84, %v67, 0.0
  %v184 = vadd.f32 %v182, %v183
  %v185 = vsel %vm84, %v68, 0.0
  %v186 = vadd.f32 %v184, %v185
  %v187 = vsel %vm84, %v69, 0.0
  %v188 = vadd.f32 %v186, %v187
  %v189 = vsel %vm84, %v70, 0.0
  %v190 = vadd.f32 %v188, %v189
  %v191 = vsel %vm84, %v71, 0.0
  %v192 = vadd.f32 %v190, %v191
  %v193 = vsel %vm84, %v72, 0.0
  %v194 = vadd.f32 %v192, %v193
  %v195 = vsel %vm84, %v73, 0.0
  %v196 = vadd.f32 %v194, %v195
  %v197 = vsel %vm84, %v74, 0.0
  %v198 = vadd.f32 %v196, %v197
  %v199 = vsel %vm84, %v75, 0.0
  %v200 = vadd.f32 %v198, %v199
  %v201 = vsel %vm84, %v76, 0.0
  %v202 = vadd.f32 %v200, %v201
  %v203 = vsel %vm84, %v77, 0.0
  %v204 = vadd.f32 %v202, %v203
  %v205 = vsel %vm84, %v78, 0.0
  %v206 = vadd.f32 %v204, %v205
  %v207 = vsel %vm84, %v79, 0.0
  %v208 = vadd.f32 %v206, %v207
  %v209 = vsel %vm84, %v80, 0.0
  %v210 = vadd.f32 %v208, %v209
  %v211 = vsel %vm84, %v81, 0.0
  %v212 = vadd.f32 %v210, %v211
  %v213 = vsel %vm84, %v82, 0.0
  %v214 = vadd.f32 %v212, %v213
  %v215 = vsel %vm84, %v83, 0.0
  %v216 = vadd.f32 %v214, %v215
  %v217 = vrot.slane %v216, 4
  %v218 = vadd.f32 %v216, %v217
  %v219 = vrot.slane %v218, 2
  %v220 = vadd.f32 %v218, %v219
  %v221 = vrot.slane %v220, 1
  %v222 = vadd.f32 %v220, %v221
  %v223 = vmul.f32 %v153, 0.00390625
  %v224 = vmul.f32 %v222, 0.00390625
  %v225 = vld [vmem:[%s1] sm:$0xf]
  %v226 = vld [vmem:[%s2] sm:$0x1]
  %v228 = vlaneseq
  %v229 = vshrl.u32 %v228, 7
  %v230 = vsub.s32 0, %v229
  %v231 = vrot.slane %v226, %v230
  %vm235 = vcmask 1041409
  %v236 = vsel %vm235, %v224, %v223
  %v237 = vsel %vm84, %v236, 0
  %vm239 = vcmask 1043456
  %v241 = vsel %vm239, %v225, 0
  %243 = vmatprep.subr.mxu0 0.0
  %244 = vmatpush1.msra.mxu0 %v241
  %245 = vmatprep.subr.mxu0 0.0
  %246 = vmatpush1.msra.mxu0 0.0
  %247 = vmatprep.subr.mxu0 0.0
  %248 = vmatpush1.msra.mxu0 0.0
  %249 = vmatprep.subr.mxu0 0.0
  %250 = vmatpush1.msra.mxu0 0.0
  %251 = vmatprep.subr.mxu0 0.0
  %252 = vmatpush1.msra.mxu0 0.0
  %253 = vmatprep.subr.mxu0 0.0
  %254 = vmatpush1.msra.mxu0 0.0
  %255 = vmatprep.subr.mxu0 0.0
  %256 = vmatpush1.msra.mxu0 0.0
  %257 = vmatprep.subr.mxu0 0.0
  %258 = vmatpush1.msra.mxu0 0.0
  %259 = vmatprep.subr.mxu0 0.0
  %260 = vmatpush1.msra.mxu0 0.0
  %261 = vmatprep.subr.mxu0 0.0
  %262 = vmatpush1.msra.mxu0 0.0
  %263 = vmatprep.subr.mxu0 0.0
  %264 = vmatpush1.msra.mxu0 0.0
  %265 = vmatprep.subr.mxu0 0.0
  %266 = vmatpush1.msra.mxu0 0.0
  %267 = vmatprep.subr.mxu0 0.0
  %268 = vmatpush1.msra.mxu0 0.0
  %269 = vmatprep.subr.mxu0 0.0
  %270 = vmatpush1.msra.mxu0 0.0
  %271 = vmatprep.subr.mxu0 0.0
  %272 = vmatpush1.msra.mxu0 0.0
  %273 = vmatprep.subr.mxu0 0.0
  %274 = vmatpush1.msra.mxu0 0.0
  %275 = vmatprep.subr.mxu0 0.0
  %276 = vmatpush1.msra.mxu0 0.0
  %277 = vmatprep.subr.mxu0 0.0
  %278 = vmatpush1.msra.mxu0 0.0
  %279 = vmatprep.subr.mxu0 0.0
  %280 = vmatpush1.msra.mxu0 0.0
  %281 = vmatprep.subr.mxu0 0.0
  %282 = vmatpush1.msra.mxu0 0.0
  %283 = vmatprep.subr.mxu0 0.0
  %284 = vmatpush1.msra.mxu0 0.0
  %285 = vmatprep.subr.mxu0 0.0
  %286 = vmatpush1.msra.mxu0 0.0
  %287 = vmatprep.subr.mxu0 0.0
  %288 = vmatpush1.msra.mxu0 0.0
  %289 = vmatprep.subr.mxu0 0.0
  %290 = vmatpush1.msra.mxu0 0.0
  %291 = vmatprep.subr.mxu0 0.0
  %292 = vmatpush1.msra.mxu0 0.0
  %293 = vmatprep.subr.mxu0 0.0
  %294 = vmatpush1.msra.mxu0 0.0
  %295 = vmatprep.subr.mxu0 0.0
  %296 = vmatpush1.msra.mxu0 0.0
  %297 = vmatprep.subr.mxu0 0.0
  %298 = vmatpush1.msra.mxu0 0.0
  %299 = vmatprep.subr.mxu0 0.0
  %300 = vmatpush1.msra.mxu0 0.0
  %301 = vmatprep.subr.mxu0 0.0
  %302 = vmatpush1.msra.mxu0 0.0
  %303 = vmatprep.subr.mxu0 0.0
  %304 = vmatpush1.msra.mxu0 0.0
  %305 = vmatprep.subr.mxu0 0.0
  %306 = vmatpush1.msra.mxu0 0.0
  %307 = vmatprep.mubr.f32.mxu0 0.0
  %308 = vmatmul.mubr.f32.gmra.mrb[0].mxu0 %v237
  %v309 = vpop.f32.mrb[0].mxu0
  %v310 = vadd.f32 %v231, %v309
  %v311 = vpop.f32.mrb[0].mxu0
  %312 = vdwg.mxu0
  %v313 = vmax.f32 %v310, 0.0
  %v314 = vld [vmem:[%s3] sm:$0x3]
  %v315 = vld [vmem:[%s4] sm:$0x1]
  %v317 = vlaneseq
  %v318 = vshrl.u32 %v317, 7
  %v319 = vsub.s32 0, %v318
  %v320 = vrot.slane %v315, %v319
  %vm322 = vcmask 15360
  %v324 = vsel %vm322, %v313, 0
  %vm326 = vcmask 1041408
  %v328 = vsel %vm326, %v314, 0
  %330 = vmatprep.subr.mxu0 0.0
  %331 = vmatpush1.msra.mxu0 %v328
  %332 = vmatprep.subr.mxu0 0.0
  %333 = vmatpush1.msra.mxu0 0.0
  %334 = vmatprep.subr.mxu0 0.0
  %335 = vmatpush1.msra.mxu0 0.0
  %336 = vmatprep.subr.mxu0 0.0
  %337 = vmatpush1.msra.mxu0 0.0
  %338 = vmatprep.subr.mxu0 0.0
  %339 = vmatpush1.msra.mxu0 0.0
  %340 = vmatprep.subr.mxu0 0.0
  %341 = vmatpush1.msra.mxu0 0.0
  %342 = vmatprep.subr.mxu0 0.0
  %343 = vmatpush1.msra.mxu0 0.0
  %344 = vmatprep.subr.mxu0 0.0
  %345 = vmatpush1.msra.mxu0 0.0
  %346 = vmatprep.subr.mxu0 0.0
  %347 = vmatpush1.msra.mxu0 0.0
  %348 = vmatprep.subr.mxu0 0.0
  %349 = vmatpush1.msra.mxu0 0.0
  %350 = vmatprep.subr.mxu0 0.0
  %351 = vmatpush1.msra.mxu0 0.0
  %352 = vmatprep.subr.mxu0 0.0
  %353 = vmatpush1.msra.mxu0 0.0
  %354 = vmatprep.subr.mxu0 0.0
  %355 = vmatpush1.msra.mxu0 0.0
  %356 = vmatprep.subr.mxu0 0.0
  %357 = vmatpush1.msra.mxu0 0.0
  %358 = vmatprep.subr.mxu0 0.0
  %359 = vmatpush1.msra.mxu0 0.0
  %360 = vmatprep.subr.mxu0 0.0
  %361 = vmatpush1.msra.mxu0 0.0
  %362 = vmatprep.subr.mxu0 0.0
  %363 = vmatpush1.msra.mxu0 0.0
  %364 = vmatprep.subr.mxu0 0.0
  %365 = vmatpush1.msra.mxu0 0.0
  %366 = vmatprep.subr.mxu0 0.0
  %367 = vmatpush1.msra.mxu0 0.0
  %368 = vmatprep.subr.mxu0 0.0
  %369 = vmatpush1.msra.mxu0 0.0
  %370 = vmatprep.subr.mxu0 0.0
  %371 = vmatpush1.msra.mxu0 0.0
  %372 = vmatprep.subr.mxu0 0.0
  %373 = vmatpush1.msra.mxu0 0.0
  %374 = vmatprep.subr.mxu0 0.0
  %375 = vmatpush1.msra.mxu0 0.0
  %376 = vmatprep.subr.mxu0 0.0
  %377 = vmatpush1.msra.mxu0 0.0
  %378 = vmatprep.subr.mxu0 0.0
  %379 = vmatpush1.msra.mxu0 0.0
  %380 = vmatprep.subr.mxu0 0.0
  %381 = vmatpush1.msra.mxu0 0.0
  %382 = vmatprep.subr.mxu0 0.0
  %383 = vmatpush1.msra.mxu0 0.0
  %384 = vmatprep.subr.mxu0 0.0
  %385 = vmatpush1.msra.mxu0 0.0
  %386 = vmatprep.subr.mxu0 0.0
  %387 = vmatpush1.msra.mxu0 0.0
  %388 = vmatprep.subr.mxu0 0.0
  %389 = vmatpush1.msra.mxu0 0.0
  %390 = vmatprep.subr.mxu0 0.0
  %391 = vmatpush1.msra.mxu0 0.0
  %392 = vmatprep.subr.mxu0 0.0
  %393 = vmatpush1.msra.mxu0 0.0
  %394 = vmatprep.mubr.f32.mxu0 0.0
  %395 = vmatmul.mubr.f32.gmra.mrb[0].mxu0 %v324
  %v396 = vpop.f32.mrb[0].mxu0
  %v397 = vadd.f32 %v320, %v396
  %v398 = vpop.f32.mrb[0].mxu0
  %399 = vdwg.mxu0
  %v400 = vxor.u32 %v397, 2147483648
  %v401 = vmul.f32 %v400, 1.442695
  %v402 = vpow.pop %v401
  %v403 = vadd.f32 %v402, 1.0
  %v404 = vrcp.pop %v403
  %v405 = vmul.f32 1.0, %v404
  %v408 = vunpack.c.l.s4 1966171168
  %v409 = vunpack.c.0.s8 %v408
  %v410 = vlaneseq
  %v411 = vshrl.u32 %v410, 7
  %v412 = vsub.s32 %v409, %v411
  %v413 = vrot.slane %v405, %v412
  %v414 = vcombine.high %v413, %v413
  %v416 = vunpack.c.l.s4 1966171168
  %v417 = vunpack.c.0.s8 %v416
  %v418 = vlaneseq
  %v419 = vshrl.u32 %v418, 7
  %v420 = vsub.s32 %v417, %v419
  %v421 = vrot.slane %v413, %v420
  %v423 = vunpack.c.l.s4 1966171168
  %v424 = vunpack.c.0.s8 %v423
  %v425 = vlaneseq
  %v426 = vshrl.u32 %v425, 7
  %v427 = vsub.s32 %v424, %v426
  %v428 = vrot.slane %v414, %v427
  %v429 = vlaneseq
  %v430 = vshrl.u32 %v429, 7
  %v431 = vsub.s32 0, %v430
  %v432 = vrot.slane %v421, %v431
  %v433 = vlaneseq
  %v434 = vshrl.u32 %v433, 7
  %v435 = vsub.s32 0, %v434
  %v436 = vrot.slane %v428, %v435
  %v439 = vmul.f32 %v20, %v432
  %v440 = vmul.f32 %v21, %v432
  %v441 = vmul.f32 %v22, %v432
  %v442 = vmul.f32 %v23, %v432
  %v443 = vmul.f32 %v24, %v432
  %v444 = vmul.f32 %v25, %v432
  %v445 = vmul.f32 %v26, %v432
  %v446 = vmul.f32 %v27, %v432
  %v447 = vmul.f32 %v28, %v432
  %v448 = vmul.f32 %v29, %v432
  %v449 = vmul.f32 %v30, %v432
  %v450 = vmul.f32 %v31, %v432
  %v451 = vmul.f32 %v32, %v432
  %v452 = vmul.f32 %v33, %v432
  %v453 = vmul.f32 %v34, %v432
  %v454 = vmul.f32 %v35, %v432
  %v455 = vmul.f32 %v36, %v432
  %v456 = vmul.f32 %v37, %v432
  %v457 = vmul.f32 %v38, %v432
  %v458 = vmul.f32 %v39, %v432
  %v459 = vmul.f32 %v40, %v432
  %v460 = vmul.f32 %v41, %v432
  %v461 = vmul.f32 %v42, %v432
  %v462 = vmul.f32 %v43, %v432
  %v463 = vmul.f32 %v44, %v432
  %v464 = vmul.f32 %v45, %v432
  %v465 = vmul.f32 %v46, %v432
  %v466 = vmul.f32 %v47, %v432
  %v467 = vmul.f32 %v48, %v432
  %v468 = vmul.f32 %v49, %v432
  %v469 = vmul.f32 %v50, %v432
  %v470 = vmul.f32 %v51, %v432
  %v471 = vmul.f32 %v52, %v436
  %v472 = vmul.f32 %v53, %v436
  %v473 = vmul.f32 %v54, %v436
  %v474 = vmul.f32 %v55, %v436
  %v475 = vmul.f32 %v56, %v436
  %v476 = vmul.f32 %v57, %v436
  %v477 = vmul.f32 %v58, %v436
  %v478 = vmul.f32 %v59, %v436
  %v479 = vmul.f32 %v60, %v436
  %v480 = vmul.f32 %v61, %v436
  %v481 = vmul.f32 %v62, %v436
  %v482 = vmul.f32 %v63, %v436
  %v483 = vmul.f32 %v64, %v436
  %v484 = vmul.f32 %v65, %v436
  %v485 = vmul.f32 %v66, %v436
  %v486 = vmul.f32 %v67, %v436
  %v487 = vmul.f32 %v68, %v436
  %v488 = vmul.f32 %v69, %v436
  %v489 = vmul.f32 %v70, %v436
  %v490 = vmul.f32 %v71, %v436
  %v491 = vmul.f32 %v72, %v436
  %v492 = vmul.f32 %v73, %v436
  %v493 = vmul.f32 %v74, %v436
  %v494 = vmul.f32 %v75, %v436
  %v495 = vmul.f32 %v76, %v436
  %v496 = vmul.f32 %v77, %v436
  %v497 = vmul.f32 %v78, %v436
  %v498 = vmul.f32 %v79, %v436
  %v499 = vmul.f32 %v80, %v436
  %v500 = vmul.f32 %v81, %v436
  %v501 = vmul.f32 %v82, %v436
  %v502 = vmul.f32 %v83, %v436
  %503 = vst.msk [vmem:[%s5] sm:$0xff] %vm84, %v439
  %504 = vst.msk [vmem:[%s5 + $0x8] sm:$0xff] %vm84, %v440
  %505 = vst.msk [vmem:[%s5 + $0x10] sm:$0xff] %vm84, %v441
  %506 = vst.msk [vmem:[%s5 + $0x18] sm:$0xff] %vm84, %v442
  %507 = vst.msk [vmem:[%s5 + $0x20] sm:$0xff] %vm84, %v443
  %508 = vst.msk [vmem:[%s5 + $0x28] sm:$0xff] %vm84, %v444
  %509 = vst.msk [vmem:[%s5 + $0x30] sm:$0xff] %vm84, %v445
  %510 = vst.msk [vmem:[%s5 + $0x38] sm:$0xff] %vm84, %v446
  %511 = vst.msk [vmem:[%s5 + $0x40] sm:$0xff] %vm84, %v447
  %512 = vst.msk [vmem:[%s5 + $0x48] sm:$0xff] %vm84, %v448
  %513 = vst.msk [vmem:[%s5 + $0x50] sm:$0xff] %vm84, %v449
  %514 = vst.msk [vmem:[%s5 + $0x58] sm:$0xff] %vm84, %v450
  %515 = vst.msk [vmem:[%s5 + $0x60] sm:$0xff] %vm84, %v451
  %516 = vst.msk [vmem:[%s5 + $0x68] sm:$0xff] %vm84, %v452
  %517 = vst.msk [vmem:[%s5 + $0x70] sm:$0xff] %vm84, %v453
  %518 = vst.msk [vmem:[%s5 + $0x78] sm:$0xff] %vm84, %v454
  %519 = vst.msk [vmem:[%s5 + $0x80] sm:$0xff] %vm84, %v455
  %520 = vst.msk [vmem:[%s5 + $0x88] sm:$0xff] %vm84, %v456
  %521 = vst.msk [vmem:[%s5 + $0x90] sm:$0xff] %vm84, %v457
  %522 = vst.msk [vmem:[%s5 + $0x98] sm:$0xff] %vm84, %v458
  %523 = vst.msk [vmem:[%s5 + $0xa0] sm:$0xff] %vm84, %v459
  %524 = vst.msk [vmem:[%s5 + $0xa8] sm:$0xff] %vm84, %v460
  %525 = vst.msk [vmem:[%s5 + $0xb0] sm:$0xff] %vm84, %v461
  %526 = vst.msk [vmem:[%s5 + $0xb8] sm:$0xff] %vm84, %v462
  %527 = vst.msk [vmem:[%s5 + $0xc0] sm:$0xff] %vm84, %v463
  %528 = vst.msk [vmem:[%s5 + $0xc8] sm:$0xff] %vm84, %v464
  %529 = vst.msk [vmem:[%s5 + $0xd0] sm:$0xff] %vm84, %v465
  %530 = vst.msk [vmem:[%s5 + $0xd8] sm:$0xff] %vm84, %v466
  %531 = vst.msk [vmem:[%s5 + $0xe0] sm:$0xff] %vm84, %v467
  %532 = vst.msk [vmem:[%s5 + $0xe8] sm:$0xff] %vm84, %v468
  %533 = vst.msk [vmem:[%s5 + $0xf0] sm:$0xff] %vm84, %v469
  %534 = vst.msk [vmem:[%s5 + $0xf8] sm:$0xff] %vm84, %v470
  %535 = vst.msk [vmem:[%s5 + $0x100] sm:$0xff] %vm84, %v471
  %536 = vst.msk [vmem:[%s5 + $0x108] sm:$0xff] %vm84, %v472
  %537 = vst.msk [vmem:[%s5 + $0x110] sm:$0xff] %vm84, %v473
  %538 = vst.msk [vmem:[%s5 + $0x118] sm:$0xff] %vm84, %v474
  %539 = vst.msk [vmem:[%s5 + $0x120] sm:$0xff] %vm84, %v475
  %540 = vst.msk [vmem:[%s5 + $0x128] sm:$0xff] %vm84, %v476
  %541 = vst.msk [vmem:[%s5 + $0x130] sm:$0xff] %vm84, %v477
  %542 = vst.msk [vmem:[%s5 + $0x138] sm:$0xff] %vm84, %v478
  %543 = vst.msk [vmem:[%s5 + $0x140] sm:$0xff] %vm84, %v479
  %544 = vst.msk [vmem:[%s5 + $0x148] sm:$0xff] %vm84, %v480
  %545 = vst.msk [vmem:[%s5 + $0x150] sm:$0xff] %vm84, %v481
  %546 = vst.msk [vmem:[%s5 + $0x158] sm:$0xff] %vm84, %v482
  %547 = vst.msk [vmem:[%s5 + $0x160] sm:$0xff] %vm84, %v483
  %548 = vst.msk [vmem:[%s5 + $0x168] sm:$0xff] %vm84, %v484
  %549 = vst.msk [vmem:[%s5 + $0x170] sm:$0xff] %vm84, %v485
  %550 = vst.msk [vmem:[%s5 + $0x178] sm:$0xff] %vm84, %v486
  %551 = vst.msk [vmem:[%s5 + $0x180] sm:$0xff] %vm84, %v487
  %552 = vst.msk [vmem:[%s5 + $0x188] sm:$0xff] %vm84, %v488
  %553 = vst.msk [vmem:[%s5 + $0x190] sm:$0xff] %vm84, %v489
  %554 = vst.msk [vmem:[%s5 + $0x198] sm:$0xff] %vm84, %v490
  %555 = vst.msk [vmem:[%s5 + $0x1a0] sm:$0xff] %vm84, %v491
  %556 = vst.msk [vmem:[%s5 + $0x1a8] sm:$0xff] %vm84, %v492
  %557 = vst.msk [vmem:[%s5 + $0x1b0] sm:$0xff] %vm84, %v493
  %558 = vst.msk [vmem:[%s5 + $0x1b8] sm:$0xff] %vm84, %v494
  %559 = vst.msk [vmem:[%s5 + $0x1c0] sm:$0xff] %vm84, %v495
  %560 = vst.msk [vmem:[%s5 + $0x1c8] sm:$0xff] %vm84, %v496
  %561 = vst.msk [vmem:[%s5 + $0x1d0] sm:$0xff] %vm84, %v497
  %562 = vst.msk [vmem:[%s5 + $0x1d8] sm:$0xff] %vm84, %v498
  %563 = vst.msk [vmem:[%s5 + $0x1e0] sm:$0xff] %vm84, %v499
  %564 = vst.msk [vmem:[%s5 + $0x1e8] sm:$0xff] %vm84, %v500
  %565 = vst.msk [vmem:[%s5 + $0x1f0] sm:$0xff] %vm84, %v501
  %566 = vst.msk [vmem:[%s5 + $0x1f8] sm:$0xff] %vm84, %v502
  // Predicated region
  $region22: #{tpu_custom_call.1} parent=0 // pred_check
    _
  $region23: #{tpu_custom_call.1} parent=0 // pred_check_branch
    %568 = sbr.rel (0) target = $region25
  $region24: #{tpu_custom_call.1} parent=0 // pred_region
    _
  $region25: #{tpu_custom_call.1} parent=0 // pred_fallthru
    _
  // Predicated region
  $region26: #{tpu_custom_call.1} parent=0 // pred_check
    _
  $region27: #{tpu_custom_call.1} parent=0 // pred_check_branch
    %570 = sbr.rel (0) target = $region29
  $region28: #{tpu_custom_call.1} parent=0 // pred_region
    _
  $region29: #{tpu_custom_call.1} parent=0 // pred_fallthru
    _

</llo_original>
